<compile_context>
chip_gen: v6e
topology: v6e:2x2x1
jax: 0.10.0
libtpu: 0.0.40
codegen_flags: <defaults>
</compile_context>

<pallas_src>
import functools

import jax
import jax.numpy as jnp
from jax.experimental import pallas as pl
from jax.experimental.pallas import tpu as pltpu


def _round_up(x, m):
    return (x + m - 1) // m * m


def _infonce_kernel(index_ref, anchor_ref, task_ref, out_ref,
                    m_sc, denom_sc, numer_sc, *,
                    tile_b, tile_m, b_real, m_real,
                    num_b_tiles, num_m_tiles):
    i = pl.program_id(0)   # B tile   ("parallel")
    j = pl.program_id(1)   # M tile   ("arbitrary" reduction, online softmax)

    @pl.when(j == 0)
    def _():
        m_sc[...] = jnp.full_like(m_sc, -jnp.inf)
        denom_sc[...] = jnp.zeros_like(denom_sc)
        numer_sc[...] = jnp.zeros_like(numer_sc)

    a = anchor_ref[...]          # (TB, D) bf16, already scaled by 1/temperature
    t = task_ref[...]            # (TM, D) bf16
    idx = index_ref[...]         # (1,  TM) int32 (padded entries are -1)

    # MXU matmul: contract the last (lane) dim of both operands (no t.T).
    s = jax.lax.dot_general(
        a, t,
        dimension_numbers=(((1,), (1,)), ((), ())),
        preferred_element_type=jnp.float32,
    )                                                    # (TB, TM) f32 logits

    tb, tm = s.shape

    # Online (streaming) softmax statistics across M tiles.
    m_new = jnp.maximum(m_sc[...], jnp.max(s, axis=1, keepdims=True))  # (TB,1)
    alpha = jnp.exp(m_sc[...] - m_new)                                 # (TB,1)
    e = jnp.exp(s - m_new)                                             # (TB,TM)

    if m_real != num_m_tiles * tile_m:
        # Zero-padded task rows give logit 0; drop them from the sums.
        col_ids = j * tile_m + jax.lax.broadcasted_iota(jnp.int32, (1, tm), 1)
        e = jnp.where(col_ids < m_real, e, 0.0)

    # (TB,1) iota broadcast against the (1,TM) index -> no (TB,TM) int temp.
    row_ids = i * tile_b + jax.lax.broadcasted_iota(jnp.int32, (tb, 1), 0)
    pos = row_ids == idx                                               # (TB,TM)

    denom_sc[...] = alpha * denom_sc[...] + jnp.sum(e, axis=1, keepdims=True)
    numer_sc[...] = alpha * numer_sc[...] + jnp.sum(
        jnp.where(pos, e, 0.0), axis=1, keepdims=True)
    m_sc[...] = m_new

    @pl.when(j == num_m_tiles - 1)
    def _():
        # -log(numer/denom) == log(denom) - log(numer); the tiny clamp only
        # guards the "no positive task for this anchor" degenerate case
        # (module uses a 1e-8 clamp on un-stabilized sums instead).
        loss_rows = (jnp.log(denom_sc[...])
                     - jnp.log(jnp.maximum(numer_sc[...], 1e-30)))     # (TB,1)
        if b_real != num_b_tiles * tile_b:
            valid = (i * tile_b
                     + jax.lax.broadcasted_iota(jnp.int32, (tile_b, 1), 0)) < b_real
            loss_rows = jnp.where(valid, loss_rows, 0.0)
        out_ref[...] = jnp.sum(loss_rows).reshape(1, 1, 1)


def infonce_loss(anchor_embeddings, task_embeddings, index, temperature=0.07):
    """Pallas TPU implementation of InfoNCELoss.forward."""
    anchor = jnp.asarray(anchor_embeddings, jnp.float32)
    task = jnp.asarray(task_embeddings, jnp.float32)
    B, D = anchor.shape
    M, D2 = task.shape
    assert D == D2
    inv_t = 1.0 / float(temperature)

    # --- B tiling (anchor rows) --------------------------------------------
    TB = 256 if B >= 256 else _round_up(B, 16)        # 16 = bf16 sublane pack
    B_pad = _round_up(B, TB)
    num_b_tiles = B_pad // TB

    # --- M tiling (task rows, online softmax) -------------------------------
    TM = 512 if M > 512 else M
    M_pad = _round_up(M, TM)
    num_m_tiles = M_pad // TM

    # Fold 1/temperature into the anchors once (fuses into the bf16 cast);
    # bf16 MXU operands halve the embedding DMA bytes, accumulation is f32.
    a_bf16 = (anchor * inv_t).astype(jnp.bfloat16)
    t_bf16 = task.astype(jnp.bfloat16)
    idx2d = jnp.asarray(index, jnp.int32).reshape(1, M)
    if B_pad != B:
        a_bf16 = jnp.pad(a_bf16, ((0, B_pad - B), (0, 0)))
    if M_pad != M:
        t_bf16 = jnp.pad(t_bf16, ((0, M_pad - M), (0, 0)))
        idx2d = jnp.pad(idx2d, ((0, 0), (0, M_pad - M)), constant_values=-1)

    kernel = functools.partial(
        _infonce_kernel,
        tile_b=TB, tile_m=TM, b_real=B, m_real=M,
        num_b_tiles=num_b_tiles, num_m_tiles=num_m_tiles)

    # Single-buffer operands whose block never changes across the grid.
    if num_m_tiles == 1:
        idx_spec = pl.BlockSpec((1, TM), lambda i, j: (0, j),
                                pipeline_mode=pl.Buffered(1))
        task_spec = pl.BlockSpec((TM, D), lambda i, j: (j, 0),
                                 pipeline_mode=pl.Buffered(1))
    else:
        idx_spec = pl.BlockSpec((1, TM), lambda i, j: (0, j))
        task_spec = pl.BlockSpec((TM, D), lambda i, j: (j, 0))
    anchor_spec = pl.BlockSpec((TB, D), lambda i, j: (i, 0))

    # VMEM budget: double-buffered bf16 tiles + f32 (TB,TM) temps + scratch,
    # with headroom; clamp to the v7x 64 MiB physical VMEM.
    vmem_needed = (2 * TM * D * 2 + 2 * TB * D * 2 + 2 * TM * 4
                   + 4 * TB * TM * 4 + 4 * TB * 4 + (2 << 20))
    vmem_limit = int(min(max(2 * vmem_needed, 32 << 20), 64 << 20))

    cost = pl.CostEstimate(
        flops=2 * B_pad * M_pad * D,
        transcendentals=B_pad * M_pad,
        bytes_accessed=(a_bf16.size * 2 + t_bf16.size * 2
                        + idx2d.size * 4 + num_b_tiles * 4))

    partials = pl.pallas_call(
        kernel,
        out_shape=jax.ShapeDtypeStruct((num_b_tiles, 1, 1), jnp.float32),
        grid=(num_b_tiles, num_m_tiles),
        in_specs=[idx_spec, anchor_spec, task_spec],
        out_specs=pl.BlockSpec((1, 1, 1), lambda i, j: (i, 0, 0)),
        scratch_shapes=[pltpu.VMEM((TB, 1), jnp.float32),   # running row max
                        pltpu.VMEM((TB, 1), jnp.float32),   # running denom
                        pltpu.VMEM((TB, 1), jnp.float32)],  # running numer
        compiler_params=pltpu.CompilerParams(
            # B axis parallel (megacore on v7x); M axis reduces into scratch.
            dimension_semantics=("parallel", "arbitrary"),
            vmem_limit_bytes=vmem_limit),
        cost_estimate=cost,
    )(idx2d, a_bf16, t_bf16)

    return jnp.sum(partials) * (1.0 / float(B))


def _infonce_ref_matched(anchor, task, index, temperature=0.07):
    """Pure-JAX reference mirroring the kernel math (bf16 matmul, stable LSE)."""
    anchor = jnp.asarray(anchor, jnp.float32)
    task = jnp.asarray(task, jnp.float32)
    B, _ = anchor.shape
    index = jnp.asarray(index, jnp.int32)
    a = (anchor / temperature).astype(jnp.bfloat16)
    t = task.astype(jnp.bfloat16)
    sim = jnp.dot(a, t.T, preferred_element_type=jnp.float32)
    row_max = sim.max(axis=1, keepdims=True)
    e = jnp.exp(sim - row_max)
    pos = jnp.arange(B)[:, None] == index[None, :]
    denom = e.sum(axis=1, keepdims=True)
    numer = jnp.where(pos, e, 0.0).sum(axis=1, keepdims=True)
    loss = jnp.log(denom) - jnp.log(jnp.maximum(numer, 1e-30))
    return loss.mean()


def _infonce_ref_naive(anchor, task, index, temperature=0.07):
    """Exact (un-stabilized) formula of the PyTorch module, full f32."""
    B, _ = anchor.shape
    index = jnp.asarray(index, jnp.int32)
    pos_mask = (jnp.arange(B)[:, None] == index[None, :]).astype(jnp.float32)
    sim = (anchor @ task.T) / temperature
    exp_sim = jnp.exp(sim)
    denom = jnp.clip(exp_sim.sum(axis=1, keepdims=True), 1e-8, None)
    numer = jnp.clip((pos_mask * exp_sim).sum(axis=1, keepdims=True), 1e-8, None)
    return jnp.mean(-jnp.log(numer / denom))


if __name__ == "__main__":
    key = jax.random.PRNGKey(0)
    k_a, k_t, k_i, k_a2, k_t2, k_i2, k_p2 = jax.random.split(key, 7)

    # --- Test 1: small canonical shapes (single B tile, single M tile) ------
    B, D, M = 8, 32, 8
    anchor = jax.random.normal(k_a, (B, D), dtype=jnp.float32)
    task = jax.random.normal(k_t, (M, D), dtype=jnp.float32)
    anchor = anchor / jnp.linalg.norm(anchor, axis=1, keepdims=True)
    task = task / jnp.linalg.norm(task, axis=1, keepdims=True)
    index = jax.random.permutation(k_i, jnp.arange(M, dtype=jnp.int32) % B)

    loss = infonce_loss(anchor, task, index, temperature=0.07)
    jax.block_until_ready(loss)

    ref_matched = _infonce_ref_matched(anchor, task, index, temperature=0.07)
    ref_naive = _infonce_ref_naive(anchor, task, index, temperature=0.07)
    assert jnp.isfinite(loss), loss
    assert jnp.allclose(loss, ref_matched, rtol=2e-3, atol=2e-3), (loss, ref_matched)
    assert jnp.allclose(loss, ref_naive, rtol=1e-1, atol=1e-1), (loss, ref_naive)

    # --- Test 2: exercises B-tiling, M-tiling + online softmax, padding -----
    B2, D2, M2 = 300, 64, 1100
    anchor2 = jax.random.normal(k_a2, (B2, D2), dtype=jnp.float32)
    task2 = jax.random.normal(k_t2, (M2, D2), dtype=jnp.float32)
    anchor2 = anchor2 / jnp.linalg.norm(anchor2, axis=1, keepdims=True)
    task2 = task2 / jnp.linalg.norm(task2, axis=1, keepdims=True)
    index2 = jnp.concatenate([
        jnp.arange(B2, dtype=jnp.int32),
        jax.random.randint(k_i2, (M2 - B2,), 0, B2, dtype=jnp.int32)])
    index2 = jax.random.permutation(k_p2, index2)

    loss2 = infonce_loss(anchor2, task2, index2, temperature=0.07)
    jax.block_until_ready(loss2)
    ref2 = _infonce_ref_matched(anchor2, task2, index2, temperature=0.07)
    assert jnp.isfinite(loss2), loss2
    assert jnp.allclose(loss2, ref2, rtol=2e-3, atol=2e-3), (loss2, ref2)

    print("KERNEL_OK")
</pallas_src>

<mosaic_0001>
module attributes {stable_mosaic.version = 11 : i64} {
  func.func @_infonce_kernel(%arg0: i32, %arg1: i32, %arg2: memref<1x8xi32, #tpu.memory_space<vmem>>, %arg3: memref<16x32xbf16, #tpu.memory_space<vmem>>, %arg4: memref<8x32xbf16, #tpu.memory_space<vmem>>, %arg5: memref<1x1x1xf32, #tpu.memory_space<vmem>>, %arg6: memref<16x1xf32, #tpu.memory_space<vmem>>, %arg7: memref<16x1xf32, #tpu.memory_space<vmem>>, %arg8: memref<16x1xf32, #tpu.memory_space<vmem>>) attributes {dimension_semantics = [#tpu.dimension_semantics<parallel>, #tpu.dimension_semantics<arbitrary>], iteration_bounds = array<i64: 1, 1>, scalar_prefetch = 0 : i64, scratch_operands = 3 : i64, tpu.core_type = #tpu.core_type<tc>, window_params = [{pipeline_mode = #tpu.pipeline_mode<synchronous>, transform_indices = @transform_0, window_bounds = array<i64: 1, 8>}, {transform_indices = @transform_1, window_bounds = array<i64: 16, 32>}, {pipeline_mode = #tpu.pipeline_mode<synchronous>, transform_indices = @transform_2, window_bounds = array<i64: 8, 32>}, {transform_indices = @transform_3, window_bounds = array<i64: 1, 1, 1>}]} {
    %c0_i32 = arith.constant 0 : i32
    %0 = arith.cmpi eq, %arg1, %c0_i32 : i32
    %1 = arith.extui %0 : i1 to i32
    %c0_i32_0 = arith.constant 0 : i32
    %2 = arith.cmpi ne, %1, %c0_i32_0 : i32
    scf.if %2 {
      %cst_26 = arith.constant 0xFF800000 : f32
      %42 = vector.broadcast %cst_26 : f32 to vector<16x1xf32>
      %c0_27 = arith.constant 0 : index
      %c0_28 = arith.constant 0 : index
      %43 = vector.load %arg6[%c0_27, %c0_28] : memref<16x1xf32, #tpu.memory_space<vmem>>, vector<16x1xf32>
      tpu.vector_store %arg6[%c0_27, %c0_28], %42 {strides = array<i32>} : memref<16x1xf32, #tpu.memory_space<vmem>>, vector<16x1xf32>,
      %cst_29 = arith.constant 0.000000e+00 : f32
      %44 = vector.broadcast %cst_29 : f32 to vector<16x1xf32>
      %c0_30 = arith.constant 0 : index
      %c0_31 = arith.constant 0 : index
      %45 = vector.load %arg7[%c0_30, %c0_31] : memref<16x1xf32, #tpu.memory_space<vmem>>, vector<16x1xf32>
      tpu.vector_store %arg7[%c0_30, %c0_31], %44 {strides = array<i32>} : memref<16x1xf32, #tpu.memory_space<vmem>>, vector<16x1xf32>,
      %cst_32 = arith.constant 0.000000e+00 : f32
      %46 = vector.broadcast %cst_32 : f32 to vector<16x1xf32>
      %c0_33 = arith.constant 0 : index
      %c0_34 = arith.constant 0 : index
      %47 = vector.load %arg8[%c0_33, %c0_34] : memref<16x1xf32, #tpu.memory_space<vmem>>, vector<16x1xf32>
      tpu.vector_store %arg8[%c0_33, %c0_34], %46 {strides = array<i32>} : memref<16x1xf32, #tpu.memory_space<vmem>>, vector<16x1xf32>,
    } else {
    }
    %c0 = arith.constant 0 : index
    %c0_1 = arith.constant 0 : index
    %3 = vector.load %arg3[%c0, %c0_1] : memref<16x32xbf16, #tpu.memory_space<vmem>>, vector<16x32xbf16>
    %c0_2 = arith.constant 0 : index
    %c0_3 = arith.constant 0 : index
    %4 = vector.load %arg4[%c0_2, %c0_3] : memref<8x32xbf16, #tpu.memory_space<vmem>>, vector<8x32xbf16>
    %c0_4 = arith.constant 0 : index
    %c0_5 = arith.constant 0 : index
    %5 = vector.load %arg2[%c0_4, %c0_5] : memref<1x8xi32, #tpu.memory_space<vmem>>, vector<1x8xi32>
    %cst = arith.constant dense<0.000000e+00> : vector<16x8xf32>
    %6 = tpu.matmul %3, %4, %cst {dimension_numbers = #tpu.dot_dimension_numbers<[1], [1], [0], [0], [0, 0, 1, 0], [], []>} : vector<16x32xbf16>, vector<8x32xbf16>, vector<16x8xf32> -> vector<16x8xf32>
    %c0_6 = arith.constant 0 : index
    %c0_7 = arith.constant 0 : index
    %7 = vector.load %arg6[%c0_6, %c0_7] : memref<16x1xf32, #tpu.memory_space<vmem>>, vector<16x1xf32>
    %cst_8 = arith.constant dense<0xFF800000> : vector<16xf32>
    %8 = vector.multi_reduction <maximumf>, %6, %cst_8 [1] : vector<16x8xf32> to vector<16xf32>
    %9 = vector.shape_cast %8 : vector<16xf32> to vector<16x1xf32>
    %10 = arith.maximumf %7, %9 : vector<16x1xf32>
    %c0_9 = arith.constant 0 : index
    %c0_10 = arith.constant 0 : index
    %11 = vector.load %arg6[%c0_9, %c0_10] : memref<16x1xf32, #tpu.memory_space<vmem>>, vector<16x1xf32>
    %12 = arith.subf %11, %10 : vector<16x1xf32>
    %13 = math.exp %12 : vector<16x1xf32>
    %14 = vector.broadcast %10 : vector<16x1xf32> to vector<16x8xf32>
    %15 = arith.subf %6, %14 : vector<16x8xf32>
    %16 = math.exp %15 : vector<16x8xf32>
    %c16_i32 = arith.constant 16 : i32
    %17 = arith.muli %arg0, %c16_i32 : i32
    %18 = tpu.iota {dimensions = array<i32: 0>} : vector<16x1xi32>
    %19 = vector.broadcast %17 : i32 to vector<16x1xi32>
    %20 = arith.addi %19, %18 : vector<16x1xi32>
    %21 = vector.broadcast %20 : vector<16x1xi32> to vector<16x8xi32>
    %22 = vector.broadcast %5 : vector<1x8xi32> to vector<16x8xi32>
    %23 = arith.cmpi eq, %21, %22 : vector<16x8xi32>
    %c0_11 = arith.constant 0 : index
    %c0_12 = arith.constant 0 : index
    %24 = vector.load %arg7[%c0_11, %c0_12] : memref<16x1xf32, #tpu.memory_space<vmem>>, vector<16x1xf32>
    %25 = arith.mulf %13, %24 : vector<16x1xf32>
    %cst_13 = arith.constant dense<0.000000e+00> : vector<16xf32>
    %26 = vector.multi_reduction <add>, %16, %cst_13 [1] : vector<16x8xf32> to vector<16xf32>
    %27 = vector.shape_cast %26 : vector<16xf32> to vector<16x1xf32>
    %28 = arith.addf %25, %27 : vector<16x1xf32>
    %c0_14 = arith.constant 0 : index
    %c0_15 = arith.constant 0 : index
    %29 = vector.load %arg7[%c0_14, %c0_15] : memref<16x1xf32, #tpu.memory_space<vmem>>, vector<16x1xf32>
    tpu.vector_store %arg7[%c0_14, %c0_15], %28 {strides = array<i32>} : memref<16x1xf32, #tpu.memory_space<vmem>>, vector<16x1xf32>,
    %c0_16 = arith.constant 0 : index
    %c0_17 = arith.constant 0 : index
    %30 = vector.load %arg8[%c0_16, %c0_17] : memref<16x1xf32, #tpu.memory_space<vmem>>, vector<16x1xf32>
    %31 = arith.mulf %13, %30 : vector<16x1xf32>
    %cst_18 = arith.constant 0.000000e+00 : f32
    %32 = vector.broadcast %cst_18 : f32 to vector<16x8xf32>
    %33 = arith.select %23, %16, %32 : vector<16x8xi1>, vector<16x8xf32>
    %cst_19 = arith.constant dense<0.000000e+00> : vector<16xf32>
    %34 = vector.multi_reduction <add>, %33, %cst_19 [1] : vector<16x8xf32> to vector<16xf32>
    %35 = vector.shape_cast %34 : vector<16xf32> to vector<16x1xf32>
    %36 = arith.addf %31, %35 : vector<16x1xf32>
    %c0_20 = arith.constant 0 : index
    %c0_21 = arith.constant 0 : index
    %37 = vector.load %arg8[%c0_20, %c0_21] : memref<16x1xf32, #tpu.memory_space<vmem>>, vector<16x1xf32>
    tpu.vector_store %arg8[%c0_20, %c0_21], %36 {strides = array<i32>} : memref<16x1xf32, #tpu.memory_space<vmem>>, vector<16x1xf32>,
    %c0_22 = arith.constant 0 : index
    %c0_23 = arith.constant 0 : index
    %38 = vector.load %arg6[%c0_22, %c0_23] : memref<16x1xf32, #tpu.memory_space<vmem>>, vector<16x1xf32>
    tpu.vector_store %arg6[%c0_22, %c0_23], %10 {strides = array<i32>} : memref<16x1xf32, #tpu.memory_space<vmem>>, vector<16x1xf32>,
    %c0_i32_24 = arith.constant 0 : i32
    %39 = arith.cmpi eq, %arg1, %c0_i32_24 : i32
    %40 = arith.extui %39 : i1 to i32
    %c0_i32_25 = arith.constant 0 : i32
    %41 = arith.cmpi ne, %40, %c0_i32_25 : i32
    scf.if %41 {
      %c0_26 = arith.constant 0 : index
      %c0_27 = arith.constant 0 : index
      %42 = vector.load %arg7[%c0_26, %c0_27] : memref<16x1xf32, #tpu.memory_space<vmem>>, vector<16x1xf32>
      %43 = math.log %42 : vector<16x1xf32>
      %c0_28 = arith.constant 0 : index
      %c0_29 = arith.constant 0 : index
      %44 = vector.load %arg8[%c0_28, %c0_29] : memref<16x1xf32, #tpu.memory_space<vmem>>, vector<16x1xf32>
      %cst_30 = arith.constant 1.000000e-30 : f32
      %45 = vector.broadcast %cst_30 : f32 to vector<16x1xf32>
      %46 = arith.maximumf %44, %45 : vector<16x1xf32>
      %47 = math.log %46 : vector<16x1xf32>
      %48 = arith.subf %43, %47 : vector<16x1xf32>
      %c16_i32_31 = arith.constant 16 : i32
      %49 = arith.muli %arg0, %c16_i32_31 : i32
      %50 = tpu.iota {dimensions = array<i32: 0>} : vector<16x1xi32>
      %51 = vector.broadcast %49 : i32 to vector<16x1xi32>
      %52 = arith.addi %51, %50 : vector<16x1xi32>
      %c8_i32 = arith.constant 8 : i32
      %53 = vector.broadcast %c8_i32 : i32 to vector<16x1xi32>
      %54 = arith.cmpi slt, %52, %53 : vector<16x1xi32>
      %cst_32 = arith.constant 0.000000e+00 : f32
      %55 = vector.broadcast %cst_32 : f32 to vector<16x1xf32>
      %56 = arith.select %54, %48, %55 : vector<16x1xi1>, vector<16x1xf32>
      %57 = vector.shape_cast %56 : vector<16x1xf32> to vector<1x16x1xf32>
      %cst_33 = arith.constant dense<0.000000e+00> : vector<1xf32>
      %58 = vector.multi_reduction <add>, %57, %cst_33 [1, 2] : vector<1x16x1xf32> to vector<1xf32>
      %59 = vector.shape_cast %58 : vector<1xf32> to vector<1x1x1xf32>
      %60 = vector.extract %59[0, 0, 0] : f32 from vector<1x1x1xf32>
      %61 = vector.broadcast %60 : f32 to vector<1x1x1xf32>
      %c0_34 = arith.constant 0 : index
      %c0_35 = arith.constant 0 : index
      %c0_36 = arith.constant 0 : index
      %62 = vector.load %arg5[%c0_34, %c0_35, %c0_36] : memref<1x1x1xf32, #tpu.memory_space<vmem>>, vector<1x1x1xf32>
      tpu.vector_store %arg5[%c0_34, %c0_35, %c0_36], %61 {strides = array<i32>} : memref<1x1x1xf32, #tpu.memory_space<vmem>>, vector<1x1x1xf32>,
    } else {
    }
    return
  }
  func.func @transform_0(%arg0: i32, %arg1: i32) -> (i32, i32) {
    %c0_i32 = arith.constant 0 : i32
    %c0_i32_0 = arith.constant 0 : i32
    return %c0_i32, %arg1 : i32, i32
  }
  func.func @transform_1(%arg0: i32, %arg1: i32) -> (i32, i32) {
    %c0_i32 = arith.constant 0 : i32
    %c0_i32_0 = arith.constant 0 : i32
    return %arg0, %c0_i32 : i32, i32
  }
  func.func @transform_2(%arg0: i32, %arg1: i32) -> (i32, i32) {
    %c0_i32 = arith.constant 0 : i32
    %c0_i32_0 = arith.constant 0 : i32
    return %arg1, %c0_i32 : i32, i32
  }
  func.func @transform_3(%arg0: i32, %arg1: i32) -> (i32, i32, i32) {
    %c0_i32 = arith.constant 0 : i32
    %c0_i32_0 = arith.constant 0 : i32
    %c0_i32_1 = arith.constant 0 : i32
    return %arg0, %c0_i32, %c0_i32_0 : i32, i32, i32
  }
}

</mosaic_0001>

<llo_original>
// kernel: tpu_custom_call.1
$region0: #{tpu_custom_call.1}
  #allocation0 [shape = 'u32[]', space=smem, size = 0x4, offset = 0x4, fixed_abs, tag = 'smem constant byte address 0x4 - core index']
  #allocation1 [shape = 'u32[144,128]{1,0:T(1,128)}', space=vmem, size = 0x12000, scoped, tag = 'internal scratch']
  #allocation2 [shape = 'f32[16,1]{1,0:T(8,128)}', space=vmem, size = 0x2000, scoped, tag = 'scratch operand']
  #allocation3 [shape = 'f32[16,1]{1,0:T(8,128)}', space=vmem, size = 0x2000, scoped, tag = 'scratch operand']
  #allocation4 [shape = 'f32[16,1]{1,0:T(8,128)}', space=vmem, size = 0x2000, scoped, tag = 'scratch operand']
  %s0 = inlined_call_operand.hbm [shape: s32[1,8], index: 0, kind: input, shape index: {}]
  %s1 = inlined_call_operand.hbm [shape: bf16[16,32], index: 1, kind: input, shape index: {}]
  %s2 = inlined_call_operand.hbm [shape: bf16[8,32], index: 2, kind: input, shape index: {}]
  %s3 = inlined_call_operand.hbm [shape: f32[1,1,1], index: 3, kind: output, shape index: {}]
  %s4 = sld [smem:[#allocation0]]
  $region42: #{tpu_custom_call.1} parent=0
    _
  %s6 = ssub.s32 1, %s4
  %s7 = scalar_select 0, %s6, %s4
  $region1: #{tpu_custom_call.1} parent=0
    #allocation5 [shape = 'u8[512]{0}', space=vmem, size = 0x400, scoped, tag = 'input window, operand 0, single buffered']
    #allocation6 [shape = 's32[1]{0}', space=sflag, size = 0x4, scoped, tag = 'scoped memory for tpu_custom_call.1']
    #allocation7 [shape = 's32[1]{0}', space=sflag, size = 0x4, scoped, tag = 'scoped memory for tpu_custom_call.1']
    #allocation8 [shape = 'u8[4096]{0}', space=vmem, size = 0x1000, scoped, tag = 'input window, operand 1, single buffered']
    #allocation9 [shape = 's32[1]{0}', space=sflag, size = 0x4, scoped, tag = 'scoped memory for tpu_custom_call.1']
    #allocation10 [shape = 'u8[2048]{0}', space=vmem, size = 0x800, scoped, tag = 'input window, operand 2, single buffered']
    #allocation11 [shape = 'u8[512]{0}', space=vmem, size = 0x400, scoped, tag = 'output window, operand 0, single buffered']
    %8 = vsyncpa [#allocation6], 0
    %9 = vsyncpa [#allocation9], 0
    %10 = vsyncpa [#allocation7], 0
    // Predicated region
    $region2: #{tpu_custom_call.1} parent=1 // pred_check
      _
    $region3: #{tpu_custom_call.1} parent=1 // pred_check_branch
      %12 = sbr.rel (0) target = $region5
    $region4: #{tpu_custom_call.1} parent=1 // pred_region
      %s14 = ssub.s32 16, 16
      %15 = vsyncadd [#allocation6], %s14
      %s17 = sshll.u32 [#allocation5], 4
      %s18 = int_to_ptr.vmem [resolvable:$true] %s17
      %20 = dma.hbm_to_vmem [thread:$0]  %s0, 16, %s18, [#allocation6]
    $region5: #{tpu_custom_call.1} parent=1 // pred_fallthru
      _
    // Predicated region
    $region6: #{tpu_custom_call.1} parent=1 // pred_check
      _
    $region7: #{tpu_custom_call.1} parent=1 // pred_check_branch
      %22 = sbr.rel (0) target = $region9
    $region8: #{tpu_custom_call.1} parent=1 // pred_region
      %s24 = ssub.s32 128, 128
      %25 = vsyncadd [#allocation9], %s24
      %s26 = sshll.u32 [#allocation8], 4
      %s27 = int_to_ptr.vmem [resolvable:$true] %s26
      %32 = dma.hbm_to_vmem [thread:$0]  %s1, 128, %s27, [#allocation9], 64, 64, 4
    $region9: #{tpu_custom_call.1} parent=1 // pred_fallthru
      _
    // Predicated region
    $region10: #{tpu_custom_call.1} parent=1 // pred_check
      _
    $region11: #{tpu_custom_call.1} parent=1 // pred_check_branch
      %34 = sbr.rel (0) target = $region13
    $region12: #{tpu_custom_call.1} parent=1 // pred_region
      %s36 = ssub.s32 64, 64
      %37 = vsyncadd [#allocation9], %s36
      %s39 = sshll.u32 [#allocation10], 4
      %s40 = int_to_ptr.vmem [resolvable:$true] %s39
      %42 = dma.hbm_to_vmem [thread:$0]  %s2, 64, %s40, [#allocation9]
    $region13: #{tpu_custom_call.1} parent=1 // pred_fallthru
      _
    // Predicated region
    $region14: #{tpu_custom_call.1} parent=1 // pred_check
      _
    $region15: #{tpu_custom_call.1} parent=1 // pred_check_branch
      %44 = sbr.rel (0) target = $region17
    $region16: #{tpu_custom_call.1} parent=1 // pred_region
      %45 = dma.done [#allocation6], 16
    $region17: #{tpu_custom_call.1} parent=1 // pred_fallthru
      _
    // Predicated region
    $region18: #{tpu_custom_call.1} parent=1 // pred_check
      _
    $region19: #{tpu_custom_call.1} parent=1 // pred_check_branch
      %47 = sbr.rel (0) target = $region21
    $region20: #{tpu_custom_call.1} parent=1 // pred_region
      %48 = dma.done [#allocation9], 128
    $region21: #{tpu_custom_call.1} parent=1 // pred_fallthru
      _
    // Predicated region
    $region22: #{tpu_custom_call.1} parent=1 // pred_check
      _
    $region23: #{tpu_custom_call.1} parent=1 // pred_check_branch
      %50 = sbr.rel (0) target = $region25
    $region24: #{tpu_custom_call.1} parent=1 // pred_region
      %51 = dma.done [#allocation9], 64
    $region25: #{tpu_custom_call.1} parent=1 // pred_fallthru
      _
    %p53 = scmp.eq.s32.totalorder 0, 0
    // Predicated region
    $region26: #{tpu_custom_call.1} parent=1 // pred_check
      %p54 = pneg %p53
    $region27: #{tpu_custom_call.1} parent=1 // pred_check_branch
      %56 = sbr.rel (%p54) target = $region29
    $region28: #{tpu_custom_call.1} parent=1 // pred_region
      %vm57 = vcmask 7168
      %58 = vst.msk [vmem:[#allocation2] sm:$0xff] %vm57, -inf
      %59 = vst.msk [vmem:[#allocation2 + $0x8] sm:$0xff] %vm57, -inf
      %60 = vst.msk [vmem:[#allocation3] sm:$0xff] %vm57, 0.0
      %61 = vst.msk [vmem:[#allocation3 + $0x8] sm:$0xff] %vm57, 0.0
      %62 = vst.msk [vmem:[#allocation4] sm:$0xff] %vm57, 0.0
      %63 = vst.msk [vmem:[#allocation4 + $0x8] sm:$0xff] %vm57, 0.0
    $region29: #{tpu_custom_call.1} parent=1 // pred_fallthru
      _
    %v64 = vld [vmem:[#allocation8] sm:$0xf]
    %v65 = vld [vmem:[#allocation8 + $0x4] sm:$0xf]
    %v66 = vld [vmem:[#allocation10] sm:$0xf]
    %v67 = vld [vmem:[#allocation5] sm:$0x1]
    %v70 = vunpack.c.l.b16 %v64
    %v71 = vunpack.c.l.b16 %v65
    %v72 = vpack.c.b16 %v71, %v70
    %vm73 = vcmask 261120
    %v75 = vsel %vm73, %v72, 0
    %v78 = vsel %vm73, %v66, 0
    %80 = vmatprep.subr.bf16.mxu0 0
    %81 = vmatpush1.bf16.xpose.msra.mxu0 0
    %82 = vmatprep.subr.bf16.mxu0 0
    %83 = vmatpush1.bf16.xpose.msra.mxu0 0
    %84 = vmatprep.subr.bf16.mxu0 0
    %85 = vmatpush1.bf16.xpose.msra.mxu0 0
    %86 = vmatprep.subr.bf16.mxu0 0
    %87 = vmatpush1.bf16.xpose.msra.mxu0 0
    %88 = vmatprep.subr.bf16.mxu0 0
    %89 = vmatpush1.bf16.xpose.msra.mxu0 0
    %90 = vmatprep.subr.bf16.mxu0 0
    %91 = vmatpush1.bf16.xpose.msra.mxu0 0
    %92 = vmatprep.subr.bf16.mxu0 0
    %93 = vmatpush1.bf16.xpose.msra.mxu0 0
    %94 = vmatprep.subr.bf16.mxu0 0
    %95 = vmatpush1.bf16.xpose.msra.mxu0 %v78
    %96 = vmatprep.subr.bf16.mxu0 0
    %97 = vmatpush2.bf16.xpose.msra.mxu0 0
    %98 = vmatprep.subr.bf16.mxu0 0
    %99 = vmatpush2.bf16.xpose.msra.mxu0 0
    %100 = vmatprep.subr.bf16.mxu0 0
    %101 = vmatpush2.bf16.xpose.msra.mxu0 0
    %102 = vmatprep.subr.bf16.mxu0 0
    %103 = vmatpush2.bf16.xpose.msra.mxu0 0
    %104 = vmatprep.subr.bf16.mxu0 0
    %105 = vmatpush2.bf16.xpose.msra.mxu0 0
    %106 = vmatprep.subr.bf16.mxu0 0
    %107 = vmatpush2.bf16.xpose.msra.mxu0 0
    %108 = vmatprep.subr.bf16.mxu0 0
    %109 = vmatpush2.bf16.xpose.msra.mxu0 0
    %110 = vmatprep.subr.bf16.mxu0 0
    %111 = vmatpush2.bf16.xpose.msra.mxu0 0
    %112 = vmatprep.mubr.bf16.mxu0 0
    %113 = vmatmul.mubr.bf16.gmra.mxu0 %v75
    %v114 = vpop.f32.mrf.mxu0
    %v115 = vadd.f32 0.0, %v114
    %v116 = vpop.f32.mrf.mxu0
    %v117 = vpop.f32.mrf.mxu0
    %v118 = vadd.f32 0.0, %v117
    %v119 = vpop.f32.mrf.mxu0
    %120 = vdwg.mxu0
    %v121 = vld [vmem:[#allocation2] sm:$0xff]
    %v122 = vld [vmem:[#allocation2 + $0x8] sm:$0xff]
    %vm123 = vcmask 64512
    %v124 = vsel %vm123, %v115, -inf
    %125 = vmax.xlane.f32.xlu0 %v124
    %v126 = vpop.xlane.xlu0 %125
    %v127 = vsel %vm123, %v118, -inf
    %128 = vmax.xlane.f32.xlu0 %v127
    %v129 = vpop.xlane.xlu0 %128
    %v130 = vmax.f32 %v121, %v126
    %v131 = vmax.f32 %v122, %v129
    %v132 = vsub.f32 %v121, %v130
    %v133 = vsub.f32 %v122, %v131
    %v134 = vmul.f32 %v132, 1.442695
    %v135 = vpow.pop %v134
    %v136 = vmul.f32 %v133, 1.442695
    %v137 = vpow.pop %v136
    %139 = vset.pattern.permute.xlu0 0
    %140 = vperm.xlu0 %139, %v130
    %v141 = vpop.permute.xlu0 %140
    %144 = vset.pattern.permute.xlu0 0
    %145 = vperm.xlu0 %144, %v131
    %v146 = vpop.permute.xlu0 %145
    %v148 = vsub.f32 %v115, %v141
    %v149 = vsub.f32 %v118, %v146
    %v150 = vmul.f32 %v148, 1.442695
    %v151 = vpow.pop %v150
    %v152 = vmul.f32 %v149, 1.442695
    %v153 = vpow.pop %v152
    %s154 = smul.u32 0, 16
    %v155 = vlaneseq
    %v156 = vshrl.u32 %v155, 7
    %v157 = vadd.s32 %v156, 8
    %v158 = vstv %s154
    %v159 = vadd.s32 %v158, %v156
    %v160 = vadd.s32 %v158, %v157
    %v161 = vlaneseq
    %v162 = vshrl.u32 %v161, 7
    %v163 = vsub.s32 0, %v162
    %v164 = vrot.slane %v67, %v163
    %vm165 = vcmp.eq.s32.totalorder %v159, %v164
    %vm166 = vcmp.eq.s32.totalorder %v160, %v164
    %v167 = vld [vmem:[#allocation3] sm:$0xff]
    %v168 = vld [vmem:[#allocation3 + $0x8] sm:$0xff]
    %v169 = vmul.f32 %v135, %v167
    %v170 = vmul.f32 %v137, %v168
    %v171 = vsel %vm123, %v151, 0.0
    %172 = vadd.xlane.f32.xlu0 %v171
    %v173 = vpop.xlane.xlu0 %172
    %v174 = vsel %vm123, %v153, 0.0
    %175 = vadd.xlane.f32.xlu0 %v174
    %v176 = vpop.xlane.xlu0 %175
    %v177 = vadd.f32 %v169, %v173
    %v178 = vadd.f32 %v170, %v176
    %vm179 = vcmask 7168
    %180 = vst.msk [vmem:[#allocation3] sm:$0xff] %vm179, %v177
    %181 = vst.msk [vmem:[#allocation3 + $0x8] sm:$0xff] %vm179, %v178
    %v182 = vld [vmem:[#allocation4] sm:$0xff]
    %v183 = vld [vmem:[#allocation4 + $0x8] sm:$0xff]
    %v184 = vmul.f32 %v135, %v182
    %v185 = vmul.f32 %v137, %v183
    %v186 = vsel %vm165, %v151, 0.0
    %v187 = vsel %vm166, %v153, 0.0
    %v188 = vsel %vm123, %v186, 0.0
    %189 = vadd.xlane.f32.xlu0 %v188
    %v190 = vpop.xlane.xlu0 %189
    %v191 = vsel %vm123, %v187, 0.0
    %192 = vadd.xlane.f32.xlu0 %v191
    %v193 = vpop.xlane.xlu0 %192
    %v194 = vadd.f32 %v184, %v190
    %v195 = vadd.f32 %v185, %v193
    %196 = vst.msk [vmem:[#allocation4] sm:$0xff] %vm179, %v194
    %197 = vst.msk [vmem:[#allocation4 + $0x8] sm:$0xff] %vm179, %v195
    %198 = vst.msk [vmem:[#allocation2] sm:$0xff] %vm179, %v130
    %199 = vst.msk [vmem:[#allocation2 + $0x8] sm:$0xff] %vm179, %v131
    // Predicated region
    $region30: #{tpu_custom_call.1} parent=1 // pred_check
      %p200 = pneg %p53
    $region31: #{tpu_custom_call.1} parent=1 // pred_check_branch
      %202 = sbr.rel (%p200) target = $region33
    $region32: #{tpu_custom_call.1} parent=1 // pred_region
      %v203 = vld [vmem:[#allocation3] sm:$0xff]
      %v204 = vld [vmem:[#allocation3 + $0x8] sm:$0xff]
      %v205 = vlog2.pop %v203
      %v206 = vmul.f32 %v205, 0.6931472
      %v207 = vlog2.pop %v204
      %v208 = vmul.f32 %v207, 0.6931472
      %v209 = vld [vmem:[#allocation4] sm:$0xff]
      %v210 = vld [vmem:[#allocation4 + $0x8] sm:$0xff]
      %v211 = vmax.f32 %v209, 1e-30
      %v212 = vmax.f32 %v210, 1e-30
      %v213 = vlog2.pop %v211
      %v214 = vmul.f32 %v213, 0.6931472
      %v215 = vlog2.pop %v212
      %v216 = vmul.f32 %v215, 0.6931472
      %v217 = vsub.f32 %v206, %v214
      %v218 = vsub.f32 %v208, %v216
      %vm219 = vcmp.lt.s32.totalorder %v159, 8
      %vm220 = vcmp.lt.s32.totalorder %v160, 8
      %v221 = vsel %vm219, %v217, 0.0
      %v222 = vsel %vm220, %v218, 0.0
      %v223 = vsel %vm179, %v221, 0.0
      %v224 = vsel %vm179, %v222, 0.0
      %v225 = vadd.f32 %v223, %v224
      %226 = vadd.xlane.f32.xlu0 %v225
      %v227 = vpop.xlane.xlu0 %226
      %v228 = vrot.slane %v227, 4
      %v229 = vadd.f32 %v227, %v228
      %v230 = vrot.slane %v229, 2
      %v231 = vadd.f32 %v229, %v230
      %v232 = vrot.slane %v231, 1
      %v233 = vadd.f32 %v231, %v232
      %s234 = vtos %v233
      %v235 = vstv %s234
      %vm236 = vcmask 0
      %237 = vst.msk [vmem:[#allocation11] sm:$0x1] %vm236, %v235
    $region33: #{tpu_custom_call.1} parent=1 // pred_fallthru
      _
    // Predicated region
    $region34: #{tpu_custom_call.1} parent=1 // pred_check
      _
    $region35: #{tpu_custom_call.1} parent=1 // pred_check_branch
      %239 = sbr.rel (0) target = $region37
    $region36: #{tpu_custom_call.1} parent=1 // pred_region
      %s241 = ssub.s32 16, 16
      %242 = vsyncadd [#allocation7], %s241
      %s244 = sshll.u32 [#allocation11], 4
      %s245 = int_to_ptr.vmem [resolvable:$true] %s244
      %247 = dma.vmem_to_hbm [thread:$0]  %s245, 16, %s3, [#allocation7]
    $region37: #{tpu_custom_call.1} parent=1 // pred_fallthru
      _
    // Predicated region
    $region38: #{tpu_custom_call.1} parent=1 // pred_check
      _
    $region39: #{tpu_custom_call.1} parent=1 // pred_check_branch
      %249 = sbr.rel (0) target = $region41
    $region40: #{tpu_custom_call.1} parent=1 // pred_region
      %250 = dma.done [#allocation7], 16
    $region41: #{tpu_custom_call.1} parent=1 // pred_fallthru
      _
    %251 = vsyncpa [#allocation6], 1
    %252 = vsyncpa [#allocation9], 1
    %253 = vsyncpa [#allocation7], 1

</llo_original>
